<compile_context>
chip_gen: v6e
topology: v6e:2x2x1
jax: 0.10.0
libtpu: 0.0.40
codegen_flags: <defaults>
</compile_context>

<pallas_src>
import jax
import jax.numpy as jnp
from jax.experimental import pallas as pl
from jax.experimental.pallas import tpu as pltpu


# --------------------------------------------------------------------------
# Fused single-matmul kernel
# --------------------------------------------------------------------------
def _kron_fused_kernel(x_ref, wk_ref, bk_ref, o_ref):
    # x_ref: (TB, f1*f2); wk_ref: (f1*f2, o1*o2); bk_ref: (1, o1*o2); o_ref: (TB, o1*o2)
    acc = jnp.dot(x_ref[...], wk_ref[...], preferred_element_type=jnp.float32)
    o_ref[...] = (acc + bk_ref[...]).astype(o_ref.dtype)


# --------------------------------------------------------------------------
# Fallback: batched two-matmul kernel (batch folded into the M dimension)
# --------------------------------------------------------------------------
def _kron_two_stage_kernel(x_ref, w1t_ref, b1_ref, w2t_ref, b2_ref, o_ref):
    # x_ref: (TB, f2, f1); w1t_ref: (f1, o1); b1_ref: (1, o1)
    # w2t_ref: (f2, o2);   b2_ref: (1, o2);  o_ref: (TB, o1, o2)
    tb, f2, f1 = x_ref.shape
    o1 = w1t_ref.shape[1]
    o2 = w2t_ref.shape[1]

    x = x_ref[...].reshape(tb * f2, f1)                      # fold batch into M
    mid = jnp.dot(x, w1t_ref[...], preferred_element_type=jnp.float32)
    mid = mid + b1_ref[...]                                  # (TB*f2, o1), f32
    mid = mid.reshape(tb, f2, o1)
    mid_t = jnp.swapaxes(mid, 1, 2).reshape(tb * o1, f2)     # per-sample transpose
    ret = jnp.dot(mid_t.astype(w2t_ref.dtype), w2t_ref[...],
                  preferred_element_type=jnp.float32)
    ret = ret + b2_ref[...]                                  # (TB*o1, o2), f32
    o_ref[...] = ret.reshape(tb, o1, o2).astype(o_ref.dtype)


# --------------------------------------------------------------------------
# Wrapper
# --------------------------------------------------------------------------
def _pick_block_b(B, bytes_per_row):
    """Largest batch tile that keeps double-buffered blocks well inside VMEM
    (budget sized to be safe on v7x's smaller 64 MiB VMEM as well)."""
    budget = 4 * 1024 * 1024
    tb = min(1024, max(8, budget // max(1, bytes_per_row)))
    if tb >= B:
        return B                       # one block covering the whole batch
    return max(8, (tb // 8) * 8)       # multiple of 8 (sublane alignment)


def _pad_batch(a, B, Bp):
    if Bp == B:
        return a
    pad = [(0, Bp - B)] + [(0, 0)] * (a.ndim - 1)
    return jnp.pad(a, pad)


def kronecker_forward(x, w1, b1, w2, b2, *, block_b=None, force_two_stage=False):
    """Pallas TPU forward for Kronecker(layer1=Linear(f1,o1), layer2=Linear(f2,o2)).

    x: (B, f2*f1); w1: (o1, f1); b1: (o1,); w2: (o2, f2); b2: (o2,)
    returns: (B, o1*o2)
    """
    o1, f1 = w1.shape
    o2, f2 = w2.shape
    B = x.shape[0]
    assert x.shape[1] == f1 * f2, (x.shape, f1, f2)
    K, N = f1 * f2, o1 * o2
    out_dtype = x.dtype
    itemsize = jnp.dtype(out_dtype).itemsize

    fused_weight_bytes = K * N * itemsize
    use_fused = (not force_two_stage) and fused_weight_bytes <= 8 * 1024 * 1024

    if use_fused:
        # Fold both linears + the transpose into one matmul:
        #   Wk[k*f1+m, i*o2+j] = W1[i, m] * W2[j, k]
        #   bk[i*o2+j]         = b1[i] * sum_k W2[j, k] + b2[j]
        w1f = w1.astype(jnp.float32)
        w2f = w2.astype(jnp.float32)
        wk = jnp.einsum("im,jk->kmij", w1f, w2f).reshape(K, N).astype(out_dtype)
        bk = (b1.astype(jnp.float32)[:, None] * jnp.sum(w2f, axis=1)[None, :]
              + b2.astype(jnp.float32)[None, :]).reshape(1, N)

        tb = block_b or _pick_block_b(B, (K + N) * itemsize)
        nb = pl.cdiv(B, tb)
        Bp = nb * tb
        xp = _pad_batch(x, B, Bp)

        out = pl.pallas_call(
            _kron_fused_kernel,
            out_shape=jax.ShapeDtypeStruct((Bp, N), out_dtype),
            grid=(nb,),
            in_specs=[
                pl.BlockSpec((tb, K), lambda i: (i, 0)),
                pl.BlockSpec((K, N), lambda i: (0, 0)),   # weight resident across batch
                pl.BlockSpec((1, N), lambda i: (0, 0)),
            ],
            out_specs=pl.BlockSpec((tb, N), lambda i: (i, 0)),
            compiler_params=pltpu.CompilerParams(
                dimension_semantics=("parallel",)),
        )(xp, wk, bk)
        return out[:B] if Bp != B else out

    # ---- fallback: two batched MXU matmuls, weights kept VMEM-resident ----
    x3 = x.reshape(B, f2, f1)
    w1t = jnp.swapaxes(w1, 0, 1)                 # (f1, o1)
    w2t = jnp.swapaxes(w2, 0, 1)                 # (f2, o2)
    b1r = b1.reshape(1, o1).astype(jnp.float32)
    b2r = b2.reshape(1, o2).astype(jnp.float32)

    tb = block_b or _pick_block_b(B, (f2 * f1 + o1 * o2) * itemsize)
    nb = pl.cdiv(B, tb)
    Bp = nb * tb
    x3p = _pad_batch(x3, B, Bp)

    out = pl.pallas_call(
        _kron_two_stage_kernel,
        out_shape=jax.ShapeDtypeStruct((Bp, o1, o2), out_dtype),
        grid=(nb,),
        in_specs=[
            pl.BlockSpec((tb, f2, f1), lambda i: (i, 0, 0)),
            pl.BlockSpec((f1, o1), lambda i: (0, 0)),
            pl.BlockSpec((1, o1), lambda i: (0, 0)),
            pl.BlockSpec((f2, o2), lambda i: (0, 0)),
            pl.BlockSpec((1, o2), lambda i: (0, 0)),
        ],
        out_specs=pl.BlockSpec((tb, o1, o2), lambda i: (i, 0, 0)),
        compiler_params=pltpu.CompilerParams(
            dimension_semantics=("parallel",)),
    )(x3p, w1t, b1r, w2t, b2r)
    out = out.reshape(Bp, o1 * o2)
    return out[:B] if Bp != B else out


# --------------------------------------------------------------------------
# Pure-JAX reference (mirrors the PyTorch module)
# --------------------------------------------------------------------------
def _reference(x, w1, b1, w2, b2):
    o1, f1 = w1.shape
    o2, f2 = w2.shape
    B = x.shape[0]
    x3 = x.reshape(B, f2, f1)
    mid = jnp.einsum("bkm,im->bki", x3, w1) + b1        # layer1: (B, f2, o1)
    mid_t = jnp.swapaxes(mid, -2, -1)                   # (B, o1, f2)
    ret = jnp.einsum("bik,jk->bij", mid_t, w2) + b2     # layer2: (B, o1, o2)
    return ret.reshape(B, o1 * o2)


if __name__ == "__main__":
    # Module config: layer1 = Linear(f1, o1), layer2 = Linear(f2, o2)
    B, f1, o1, f2, o2 = 2, 32, 16, 8, 8

    key = jax.random.PRNGKey(0)
    kx, kw1, kb1, kw2, kb2 = jax.random.split(key, 5)

    x = jax.random.normal(kx, (B, f2 * f1), dtype=jnp.float32)
    w1 = jax.random.normal(kw1, (o1, f1), dtype=jnp.float32) * 0.1
    b1 = jax.random.normal(kb1, (o1,), dtype=jnp.float32) * 0.1
    w2 = jax.random.normal(kw2, (o2, f2), dtype=jnp.float32) * 0.1
    b2 = jax.random.normal(kb2, (o2,), dtype=jnp.float32) * 0.1

    ref = _reference(x, w1, b1, w2, b2)

    # Primary (fused single-matmul) path.
    out = jax.block_until_ready(kronecker_forward(x, w1, b1, w2, b2))
    assert out.shape == (B, o1 * o2), out.shape
    assert jnp.allclose(out, ref, atol=1e-4, rtol=1e-4), "fused path mismatch"

    # Fallback (batched two-matmul) path, exercised explicitly for coverage.
    out2 = jax.block_until_ready(
        kronecker_forward(x, w1, b1, w2, b2, force_two_stage=True))
    assert out2.shape == (B, o1 * o2), out2.shape
    assert jnp.allclose(out2, ref, atol=1e-4, rtol=1e-4), "two-stage path mismatch"

    print("KERNEL_OK")
</pallas_src>

<mosaic_0001>
module attributes {stable_mosaic.version = 11 : i64} {
  func.func @_kron_fused_kernel(%arg0: i32, %arg1: memref<2x256xf32, #tpu.memory_space<vmem>>, %arg2: memref<256x128xf32, #tpu.memory_space<vmem>>, %arg3: memref<1x128xf32, #tpu.memory_space<vmem>>, %arg4: memref<2x128xf32, #tpu.memory_space<vmem>>) attributes {dimension_semantics = [#tpu.dimension_semantics<parallel>], iteration_bounds = array<i64: 1>, scalar_prefetch = 0 : i64, scratch_operands = 0 : i64, tpu.core_type = #tpu.core_type<tc>, window_params = [{transform_indices = @transform_0, window_bounds = array<i64: 2, 256>}, {pipeline_mode = #tpu.pipeline_mode<synchronous>, transform_indices = @transform_1, window_bounds = array<i64: 256, 128>}, {pipeline_mode = #tpu.pipeline_mode<synchronous>, transform_indices = @transform_2, window_bounds = array<i64: 1, 128>}, {transform_indices = @transform_3, window_bounds = array<i64: 2, 128>}]} {
    %c0 = arith.constant 0 : index
    %c0_0 = arith.constant 0 : index
    %0 = vector.load %arg1[%c0, %c0_0] : memref<2x256xf32, #tpu.memory_space<vmem>>, vector<2x256xf32>
    %c0_1 = arith.constant 0 : index
    %c0_2 = arith.constant 0 : index
    %1 = vector.load %arg2[%c0_1, %c0_2] : memref<256x128xf32, #tpu.memory_space<vmem>>, vector<256x128xf32>
    %cst = arith.constant dense<0.000000e+00> : vector<2x128xf32>
    %2 = tpu.matmul %0, %1, %cst {dimension_numbers = #tpu.dot_dimension_numbers<[1], [0], [0], [1], [0, 0, 1, 1], [], []>} : vector<2x256xf32>, vector<256x128xf32>, vector<2x128xf32> -> vector<2x128xf32>
    %c0_3 = arith.constant 0 : index
    %c0_4 = arith.constant 0 : index
    %3 = vector.load %arg3[%c0_3, %c0_4] : memref<1x128xf32, #tpu.memory_space<vmem>>, vector<1x128xf32>
    %4 = vector.broadcast %3 : vector<1x128xf32> to vector<2x128xf32>
    %5 = arith.addf %2, %4 : vector<2x128xf32>
    %c0_5 = arith.constant 0 : index
    %c0_6 = arith.constant 0 : index
    %6 = vector.load %arg4[%c0_5, %c0_6] : memref<2x128xf32, #tpu.memory_space<vmem>>, vector<2x128xf32>
    tpu.vector_store %arg4[%c0_5, %c0_6], %5 {strides = array<i32>} : memref<2x128xf32, #tpu.memory_space<vmem>>, vector<2x128xf32>,
    return
  }
  func.func @transform_0(%arg0: i32) -> (i32, i32) {
    %c0_i32 = arith.constant 0 : i32
    %c0_i32_0 = arith.constant 0 : i32
    return %arg0, %c0_i32 : i32, i32
  }
  func.func @transform_1(%arg0: i32) -> (i32, i32) {
    %c0_i32 = arith.constant 0 : i32
    %c0_i32_0 = arith.constant 0 : i32
    %c0_i32_1 = arith.constant 0 : i32
    return %c0_i32, %c0_i32_0 : i32, i32
  }
  func.func @transform_2(%arg0: i32) -> (i32, i32) {
    %c0_i32 = arith.constant 0 : i32
    %c0_i32_0 = arith.constant 0 : i32
    %c0_i32_1 = arith.constant 0 : i32
    return %c0_i32, %c0_i32_0 : i32, i32
  }
  func.func @transform_3(%arg0: i32) -> (i32, i32) {
    %c0_i32 = arith.constant 0 : i32
    %c0_i32_0 = arith.constant 0 : i32
    return %arg0, %c0_i32 : i32, i32
  }
}

</mosaic_0001>

<llo_original>
// kernel: tpu_custom_call.1
$region0: #{tpu_custom_call.1}
  #allocation0 [shape = 'u32[]', space=smem, size = 0x4, offset = 0x4, fixed_abs, tag = 'smem constant byte address 0x4 - core index']
  #allocation1 [shape = 'u32[144,128]{1,0:T(1,128)}', space=vmem, size = 0x12000, scoped, tag = 'internal scratch']
  %s0 = inlined_call_operand.hbm [shape: f32[2,256], index: 0, kind: input, shape index: {}]
  %s1 = inlined_call_operand.hbm [shape: f32[256,128], index: 1, kind: input, shape index: {}]
  %s2 = inlined_call_operand.vmem [shape: f32[1,128], index: 2, kind: input, shape index: {}]
  %s3 = inlined_call_operand.hbm [shape: f32[2,128], index: 3, kind: output, shape index: {}]
  %s4 = sld [smem:[#allocation0]]
  $region30: #{tpu_custom_call.1} parent=0
    _
  %s6 = ssub.s32 1, %s4
  %s7 = scalar_select 0, %s6, %s4
  $region1: #{tpu_custom_call.1} parent=0
    #allocation2 [shape = 'u8[2048]{0}', space=vmem, size = 0x800, scoped, tag = 'input window, operand 0, single buffered']
    #allocation3 [shape = 's32[1]{0}', space=sflag, size = 0x4, scoped, tag = 'scoped memory for tpu_custom_call.1']
    #allocation4 [shape = 's32[1]{0}', space=sflag, size = 0x4, scoped, tag = 'scoped memory for tpu_custom_call.1']
    #allocation5 [shape = 'u8[131072]{0}', space=vmem, size = 0x20000, scoped, tag = 'input window, operand 1, single buffered']
    #allocation6 [shape = 's32[1]{0}', space=sflag, size = 0x4, scoped, tag = 'scoped memory for tpu_custom_call.1']
    #allocation7 [shape = 'u8[1024]{0}', space=vmem, size = 0x400, scoped, tag = 'output window, operand 0, single buffered']
    %8 = vsyncpa [#allocation3], 0
    %9 = vsyncpa [#allocation6], 0
    %10 = vsyncpa [#allocation4], 0
    // Predicated region
    $region2: #{tpu_custom_call.1} parent=1 // pred_check
      _
    $region3: #{tpu_custom_call.1} parent=1 // pred_check_branch
      %12 = sbr.rel (0) target = $region5
    $region4: #{tpu_custom_call.1} parent=1 // pred_region
      %s14 = ssub.s32 64, 64
      %15 = vsyncadd [#allocation3], %s14
      %s17 = sshll.u32 [#allocation2], 4
      %s18 = int_to_ptr.vmem [resolvable:$true] %s17
      %20 = dma.hbm_to_vmem [thread:$0]  %s0, 64, %s18, [#allocation3]
    $region5: #{tpu_custom_call.1} parent=1 // pred_fallthru
      _
    // Predicated region
    $region6: #{tpu_custom_call.1} parent=1 // pred_check
      _
    $region7: #{tpu_custom_call.1} parent=1 // pred_check_branch
      %22 = sbr.rel (0) target = $region9
    $region8: #{tpu_custom_call.1} parent=1 // pred_region
      %s24 = ssub.s32 4096, 4096
      %25 = vsyncadd [#allocation6], %s24
      %s26 = sshll.u32 [#allocation5], 4
      %s27 = int_to_ptr.vmem [resolvable:$true] %s26
      %32 = dma.hbm_to_vmem [thread:$0]  %s1, 4096, %s27, [#allocation6], 128, 128, 8
    $region9: #{tpu_custom_call.1} parent=1 // pred_fallthru
      _
    // Predicated region
    $region10: #{tpu_custom_call.1} parent=1 // pred_check
      _
    $region11: #{tpu_custom_call.1} parent=1 // pred_check_branch
      %34 = sbr.rel (0) target = $region13
    $region12: #{tpu_custom_call.1} parent=1 // pred_region
      _
    $region13: #{tpu_custom_call.1} parent=1 // pred_fallthru
      _
    // Predicated region
    $region14: #{tpu_custom_call.1} parent=1 // pred_check
      _
    $region15: #{tpu_custom_call.1} parent=1 // pred_check_branch
      %36 = sbr.rel (0) target = $region17
    $region16: #{tpu_custom_call.1} parent=1 // pred_region
      %37 = dma.done [#allocation3], 64
    $region17: #{tpu_custom_call.1} parent=1 // pred_fallthru
      _
    // Predicated region
    $region18: #{tpu_custom_call.1} parent=1 // pred_check
      _
    $region19: #{tpu_custom_call.1} parent=1 // pred_check_branch
      %39 = sbr.rel (0) target = $region21
    $region20: #{tpu_custom_call.1} parent=1 // pred_region
      %40 = dma.done [#allocation6], 4096
    $region21: #{tpu_custom_call.1} parent=1 // pred_fallthru
      _
    %v41 = vld [vmem:[#allocation2] sm:$0xf]
    %v42 = vld [vmem:[#allocation5] sm:$0xff]
    %v43 = vld [vmem:[#allocation5 + $0x8] sm:$0xff]
    %v44 = vld [vmem:[#allocation5 + $0x10] sm:$0xff]
    %v45 = vld [vmem:[#allocation5 + $0x18] sm:$0xff]
    %v46 = vld [vmem:[#allocation5 + $0x20] sm:$0xff]
    %v47 = vld [vmem:[#allocation5 + $0x28] sm:$0xff]
    %v48 = vld [vmem:[#allocation5 + $0x30] sm:$0xff]
    %v49 = vld [vmem:[#allocation5 + $0x38] sm:$0xff]
    %v50 = vld [vmem:[#allocation5 + $0x40] sm:$0xff]
    %v51 = vld [vmem:[#allocation5 + $0x48] sm:$0xff]
    %v52 = vld [vmem:[#allocation5 + $0x50] sm:$0xff]
    %v53 = vld [vmem:[#allocation5 + $0x58] sm:$0xff]
    %v54 = vld [vmem:[#allocation5 + $0x60] sm:$0xff]
    %v55 = vld [vmem:[#allocation5 + $0x68] sm:$0xff]
    %v56 = vld [vmem:[#allocation5 + $0x70] sm:$0xff]
    %v57 = vld [vmem:[#allocation5 + $0x78] sm:$0xff]
    %v58 = vld [vmem:[#allocation5 + $0x80] sm:$0xff]
    %v59 = vld [vmem:[#allocation5 + $0x88] sm:$0xff]
    %v60 = vld [vmem:[#allocation5 + $0x90] sm:$0xff]
    %v61 = vld [vmem:[#allocation5 + $0x98] sm:$0xff]
    %v62 = vld [vmem:[#allocation5 + $0xa0] sm:$0xff]
    %v63 = vld [vmem:[#allocation5 + $0xa8] sm:$0xff]
    %v64 = vld [vmem:[#allocation5 + $0xb0] sm:$0xff]
    %v65 = vld [vmem:[#allocation5 + $0xb8] sm:$0xff]
    %v66 = vld [vmem:[#allocation5 + $0xc0] sm:$0xff]
    %v67 = vld [vmem:[#allocation5 + $0xc8] sm:$0xff]
    %v68 = vld [vmem:[#allocation5 + $0xd0] sm:$0xff]
    %v69 = vld [vmem:[#allocation5 + $0xd8] sm:$0xff]
    %v70 = vld [vmem:[#allocation5 + $0xe0] sm:$0xff]
    %v71 = vld [vmem:[#allocation5 + $0xe8] sm:$0xff]
    %v72 = vld [vmem:[#allocation5 + $0xf0] sm:$0xff]
    %v73 = vld [vmem:[#allocation5 + $0xf8] sm:$0xff]
    %v74 = vld [vmem:[%s2] sm:$0x1]
    %v76 = vlaneseq
    %v77 = vshrl.u32 %v76, 7
    %v78 = vsub.s32 0, %v77
    %v79 = vrot.slane %v74, %v78
    %v83 = vunpack.c.l.s4 1983009808
    %v84 = vunpack.c.0.s8 %v83
    %v85 = vlaneseq
    %v86 = vshrl.u32 %v85, 7
    %v87 = vsub.s32 %v84, %v86
    %v88 = vrot.slane %v41, %v87
    %v89 = vcombine.high %v88, %v88
    %92 = vmatprep.subr.mxu0 0.0
    %93 = vmatpush1.msra.mxu0 %v57
    %94 = vmatprep.subr.mxu0 0.0
    %95 = vmatpush1.msra.mxu0 %v56
    %96 = vmatprep.subr.mxu0 0.0
    %97 = vmatpush1.msra.mxu0 %v55
    %98 = vmatprep.subr.mxu0 0.0
    %99 = vmatpush1.msra.mxu0 %v54
    %100 = vmatprep.subr.mxu0 0.0
    %101 = vmatpush1.msra.mxu0 %v53
    %102 = vmatprep.subr.mxu0 0.0
    %103 = vmatpush1.msra.mxu0 %v52
    %104 = vmatprep.subr.mxu0 0.0
    %105 = vmatpush1.msra.mxu0 %v51
    %106 = vmatprep.subr.mxu0 0.0
    %107 = vmatpush1.msra.mxu0 %v50
    %108 = vmatprep.subr.mxu0 0.0
    %109 = vmatpush1.msra.mxu0 %v49
    %110 = vmatprep.subr.mxu0 0.0
    %111 = vmatpush1.msra.mxu0 %v48
    %112 = vmatprep.subr.mxu0 0.0
    %113 = vmatpush1.msra.mxu0 %v47
    %114 = vmatprep.subr.mxu0 0.0
    %115 = vmatpush1.msra.mxu0 %v46
    %116 = vmatprep.subr.mxu0 0.0
    %117 = vmatpush1.msra.mxu0 %v45
    %118 = vmatprep.subr.mxu0 0.0
    %119 = vmatpush1.msra.mxu0 %v44
    %120 = vmatprep.subr.mxu0 0.0
    %121 = vmatpush1.msra.mxu0 %v43
    %122 = vmatprep.subr.mxu0 0.0
    %123 = vmatpush1.msra.mxu0 %v42
    %124 = vmatprep.subr.mxu0 0.0
    %125 = vmatpush2.msra.mxu0 %v73
    %126 = vmatprep.subr.mxu0 0.0
    %127 = vmatpush2.msra.mxu0 %v72
    %128 = vmatprep.subr.mxu0 0.0
    %129 = vmatpush2.msra.mxu0 %v71
    %130 = vmatprep.subr.mxu0 0.0
    %131 = vmatpush2.msra.mxu0 %v70
    %132 = vmatprep.subr.mxu0 0.0
    %133 = vmatpush2.msra.mxu0 %v69
    %134 = vmatprep.subr.mxu0 0.0
    %135 = vmatpush2.msra.mxu0 %v68
    %136 = vmatprep.subr.mxu0 0.0
    %137 = vmatpush2.msra.mxu0 %v67
    %138 = vmatprep.subr.mxu0 0.0
    %139 = vmatpush2.msra.mxu0 %v66
    %140 = vmatprep.subr.mxu0 0.0
    %141 = vmatpush2.msra.mxu0 %v65
    %142 = vmatprep.subr.mxu0 0.0
    %143 = vmatpush2.msra.mxu0 %v64
    %144 = vmatprep.subr.mxu0 0.0
    %145 = vmatpush2.msra.mxu0 %v63
    %146 = vmatprep.subr.mxu0 0.0
    %147 = vmatpush2.msra.mxu0 %v62
    %148 = vmatprep.subr.mxu0 0.0
    %149 = vmatpush2.msra.mxu0 %v61
    %150 = vmatprep.subr.mxu0 0.0
    %151 = vmatpush2.msra.mxu0 %v60
    %152 = vmatprep.subr.mxu0 0.0
    %153 = vmatpush2.msra.mxu0 %v59
    %154 = vmatprep.subr.mxu0 0.0
    %155 = vmatpush2.msra.mxu0 %v58
    %156 = vmatprep.mubr.f32.mxu0 %v89
    %157 = vmatmul.mubr.f32.gmra.mxu0 %v88
    %v158 = vpop.f32.mrf.mxu0
    %v159 = vadd.f32 %v79, %v158
    %v160 = vpop.f32.mrf.mxu0
    %161 = vdwg.mxu0
    %162 = vst [vmem:[#allocation7] sm:$0x3] %v159
    // Predicated region
    $region22: #{tpu_custom_call.1} parent=1 // pred_check
      _
    $region23: #{tpu_custom_call.1} parent=1 // pred_check_branch
      %164 = sbr.rel (0) target = $region25
    $region24: #{tpu_custom_call.1} parent=1 // pred_region
      %s166 = ssub.s32 32, 32
      %167 = vsyncadd [#allocation4], %s166
      %s169 = sshll.u32 [#allocation7], 4
      %s170 = int_to_ptr.vmem [resolvable:$true] %s169
      %172 = dma.vmem_to_hbm [thread:$0]  %s170, 32, %s3, [#allocation4]
    $region25: #{tpu_custom_call.1} parent=1 // pred_fallthru
      _
    // Predicated region
    $region26: #{tpu_custom_call.1} parent=1 // pred_check
      _
    $region27: #{tpu_custom_call.1} parent=1 // pred_check_branch
      %174 = sbr.rel (0) target = $region29
    $region28: #{tpu_custom_call.1} parent=1 // pred_region
      %175 = dma.done [#allocation4], 32
    $region29: #{tpu_custom_call.1} parent=1 // pred_fallthru
      _
    %176 = vsyncpa [#allocation3], 1
    %177 = vsyncpa [#allocation6], 1
    %178 = vsyncpa [#allocation4], 1

</llo_original>
